<compile_context>
chip_gen: v7x
topology: tpu7x:2x2x1
jax: 0.10.0
libtpu: 0.0.40
codegen_flags: <defaults>
</compile_context>

<pallas_src>
import functools
import math

import jax
import jax.numpy as jnp
import numpy as np
from jax.experimental import pallas as pl
from jax.experimental.pallas import tpu as pltpu

_NEG_BIG = -1e30          # masked-logit value (f32; exp() underflows to 0)
_EPS_SQ = 1e-8            # clamp on the squared row norm (see note above)

_COL_RESIDENT_BUDGET = 8 * 1024 * 1024    # raw bf16 bytes of x^T + y^T kept resident
_ROW_WORKSET_BUDGET = 24 * 1024 * 1024    # double-buffered rows + score tiles
_VMEM_LIMIT_CAP = 48 * 1024 * 1024        # stay well inside v7x's 64 MiB physical VMEM


def _contrastive_kernel(xr_ref, yr_ref, xc_ref, yc_ref, ox_ref, oy_ref,
                        m_x, l_x, m_y, l_y):
    """One (row-block i, col-block j) step of the NT-Xent forward.

    xr/yr : (t_r, D) bf16 — L2-normalized rows, pre-scaled by 1/sqrt(tau).
    xc/yc : (D, t_c) bf16 — the same tensors, pre-transposed (column operands).
    ox/oy : (t_r, 1) f32 — per-row losses for the x-/y-half, written at last j.
    m_*/l_* : (t_r, 1) f32 — online-logsumexp state (running max / sum of exp).
    """
    i = pl.program_id(0)          # row block over B   ("parallel")
    j = pl.program_id(1)          # col block over B   ("arbitrary" reduction)
    nj = pl.num_programs(1)
    t_r = xr_ref.shape[0]
    t_c = xc_ref.shape[1]

    @pl.when(j == 0)
    def _():
        m_x[...] = jnp.full_like(m_x, _NEG_BIG)
        m_y[...] = jnp.full_like(m_y, _NEG_BIG)
        l_x[...] = jnp.zeros_like(l_x)
        l_y[...] = jnp.zeros_like(l_y)

    xr = xr_ref[...]
    yr = yr_ref[...]
    xc = xc_ref[...]
    yc = yc_ref[...]

    # Four (t_r, t_c) sub-tiles of the scaled similarity matrix (logits):
    # bf16 operands on the MXU, f32 accumulation.
    s_xx = jnp.dot(xr, xc, preferred_element_type=jnp.float32)
    s_xy = jnp.dot(xr, yc, preferred_element_type=jnp.float32)
    s_yx = jnp.dot(yr, xc, preferred_element_type=jnp.float32)
    s_yy = jnp.dot(yr, yc, preferred_element_type=jnp.float32)

    # Mask self-similarity (the global diagonal).  It only lives on the x·x and
    # y·y quadrants.
    # TODO(synk): wrap in lax.cond on the row/col range overlap so fully
    # off-diagonal tiles skip the iota/compare/select when columns are streamed
    # over many j blocks (no-op for the resident-column path, where every row
    # block intersects the diagonal anyway).
    row_g = jax.lax.broadcasted_iota(jnp.int32, (t_r, t_c), 0) + i * t_r
    col_g = jax.lax.broadcasted_iota(jnp.int32, (t_r, t_c), 1) + j * t_c
    on_diag = row_g == col_g
    s_xx = jnp.where(on_diag, _NEG_BIG, s_xx)
    s_yy = jnp.where(on_diag, _NEG_BIG, s_yy)

    def update(m_ref, l_ref, a, b):
        # Online logsumexp over the column-block axis; rows of one half see the
        # concatenation [a | b] of two quadrants.
        m_old = m_ref[...]
        m_new = jnp.maximum(
            m_old,
            jnp.maximum(jnp.max(a, axis=-1, keepdims=True),
                        jnp.max(b, axis=-1, keepdims=True)))
        # TODO(synk): on v6e/v7x the 4*t_r*t_c exps are EUP-bound for small D;
        # casting (a - m_new) to bf16 before exp would ~2x them (not on v5e).
        l_new = (jnp.exp(m_old - m_new) * l_ref[...]
                 + jnp.sum(jnp.exp(a - m_new), axis=-1, keepdims=True)
                 + jnp.sum(jnp.exp(b - m_new), axis=-1, keepdims=True))
        m_ref[...] = m_new
        l_ref[...] = l_new

    update(m_x, l_x, s_xx, s_xy)      # rows coming from the x half
    update(m_y, l_y, s_yx, s_yy)      # rows coming from the y half

    @pl.when(j == nj - 1)
    def _():
        # Positive-pair logit straight from the normalized bf16 rows (f32
        # accumulate), so it shares rounding with the MXU logits; it already
        # includes the 1/tau scale and is identical for both halves.
        pos = jnp.sum(xr.astype(jnp.float32) * yr.astype(jnp.float32),
                      axis=-1, keepdims=True)
        ox_ref[...] = m_x[...] + jnp.log(l_x[...]) - pos
        oy_ref[...] = m_y[...] + jnp.log(l_y[...]) - pos


def _largest_divisor(batch_size: int, cap: int) -> int:
    for cand in (1024, 512, 256, 128, 64, 32, 16, 8):
        if cand <= cap and batch_size % cand == 0:
            return cand
    return batch_size


def _choose_tiles(batch_size: int, d: int):
    """Pick (row_tile, col_tile) for the (B/t_r, B/t_c) grid."""
    # Column operands (x^T, y^T in bf16): keep fully resident when small — they
    # are then DMA'd once instead of re-streamed B/t_r times and the j axis
    # degenerates to a single step.  Otherwise stream MXU-friendly tiles
    # (256 fills the 256-wide v6e/v7x MXU; 128 maps natively on v5e and is
    # still correct everywhere).
    col_resident_bytes = 2 * batch_size * d * 2
    if col_resident_bytes <= _COL_RESIDENT_BUDGET:
        t_c = batch_size
    elif batch_size % 256 == 0:
        t_c = 256
    elif batch_size % 128 == 0:
        t_c = 128
    else:
        # TODO(synk): pad B to a multiple of 128 instead of forcing residency.
        t_c = batch_size

    # Row tile: as large as the working-set budget allows (column re-stream
    # traffic scales with B / t_r), but keep >= 2 row blocks when possible so
    # the "parallel" row axis can use both v7x TensorCores.
    def workset(t_r):
        rows = 2 * 2 * t_r * d * 2            # xr + yr, double buffered, bf16
        scores = 6 * t_r * t_c * 4            # 4 f32 score tiles + exp temps
        return rows + scores

    cap = 1024
    while cap > 8 and workset(cap) > _ROW_WORKSET_BUDGET:
        cap //= 2
    t_r = _largest_divisor(batch_size, cap)
    if t_r == batch_size and batch_size >= 16:
        t_r = _largest_divisor(batch_size, max(8, batch_size // 2))
    return t_r, t_c


def _contrastive_loss_impl(x, y, tau, row_block, col_block):
    batch_size, d = x.shape
    inv_sqrt_tau = 1.0 / math.sqrt(float(tau))

    # One-shot normalization (hoisted out of the kernel): L2-normalize rows in
    # f32, fold in 1/sqrt(tau) so the Gram products are already logits, and
    # round to bf16 once so the kernel streams half the bytes.
    def normalize(v):
        v = v.astype(jnp.float32)
        ssq = jnp.sum(v * v, axis=-1, keepdims=True)
        inv = jax.lax.rsqrt(jnp.maximum(ssq, _EPS_SQ)) * inv_sqrt_tau
        return (v * inv).astype(jnp.bfloat16)

    xn = normalize(x)
    yn = normalize(y)
    # Pre-transposed column operands: the kernel's contraction becomes a plain
    # (t_r, D) @ (D, t_c) MXU matmul (no per-step XLU transpose of col tiles).
    xnt = xn.T
    ynt = yn.T

    auto_r, auto_c = _choose_tiles(batch_size, d)
    t_r = row_block if row_block is not None else auto_r
    t_c = col_block if col_block is not None else auto_c
    if batch_size % t_r != 0 or batch_size % t_c != 0:
        raise ValueError(
            f"tiles ({t_r}, {t_c}) must divide batch_size {batch_size}")
    if t_c != batch_size and t_c % 128 != 0:
        raise ValueError("col_block must be the full batch or a multiple of 128")
    nb_r = batch_size // t_r
    nb_c = batch_size // t_c

    # Working-set estimate -> explicit scoped-VMEM limit (v7x: 64 MiB physical).
    est = (2 * 2 * t_r * d * 2          # row tiles, double buffered (bf16)
           + 2 * 2 * d * t_c * 2        # col tiles, double buffered (bf16)
           + 6 * t_r * t_c * 4          # score tiles + exp temporaries (f32)
           + 8 * t_r * 128 * 4)         # (t_r, 1) outputs/scratch, lane padded
    vmem_limit = int(min(_VMEM_LIMIT_CAP,
                         max(32 * 1024 * 1024, est + (8 << 20))))

    # TODO(synk): if profiling still shows exposed DMA when nb_c > 2, add
    # pipeline_mode=pl.Buffered(3) on the two column BlockSpecs only.
    out_x, out_y = pl.pallas_call(
        _contrastive_kernel,
        out_shape=(jax.ShapeDtypeStruct((batch_size, 1), jnp.float32),
                   jax.ShapeDtypeStruct((batch_size, 1), jnp.float32)),
        grid_spec=pltpu.PrefetchScalarGridSpec(
            num_scalar_prefetch=0,
            grid=(nb_r, nb_c),
            in_specs=[
                pl.BlockSpec((t_r, d), lambda i, j: (i, 0)),   # x rows  (bf16)
                pl.BlockSpec((t_r, d), lambda i, j: (i, 0)),   # y rows  (bf16)
                pl.BlockSpec((d, t_c), lambda i, j: (0, j)),   # x^T cols (bf16)
                pl.BlockSpec((d, t_c), lambda i, j: (0, j)),   # y^T cols (bf16)
            ],
            out_specs=[
                pl.BlockSpec((t_r, 1), lambda i, j: (i, 0)),   # loss, x half
                pl.BlockSpec((t_r, 1), lambda i, j: (i, 0)),   # loss, y half
            ],
            scratch_shapes=[pltpu.VMEM((t_r, 1), jnp.float32)] * 4,
        ),
        compiler_params=pltpu.CompilerParams(
            dimension_semantics=("parallel", "arbitrary"),
            vmem_limit_bytes=vmem_limit),
    )(xn, yn, xnt, ynt)
    return (jnp.sum(out_x) + jnp.sum(out_y)) / (2 * batch_size)


@functools.partial(jax.jit, static_argnames=("tau", "row_block", "col_block"))
def contrastive_loss(x, y, *, tau, row_block=None, col_block=None):
    """Pallas implementation of ContrastiveLoss.forward(x, y)."""
    assert x.shape == y.shape and x.ndim == 2
    return _contrastive_loss_impl(x, y, tau, row_block, col_block)


def _reference_loss(x, y, tau):
    """Pure-JAX reference matching the PyTorch module (for sanity check)."""
    xy = jnp.concatenate([x, y], axis=0).astype(jnp.float32)
    n = xy.shape[0]
    b = n // 2
    norms = jnp.sqrt(jnp.sum(xy * xy, axis=-1))
    denom = jnp.maximum(norms[:, None] * norms[None, :], 1e-8)
    sim = (xy @ xy.T) / denom
    logits = sim / tau
    pos = jnp.concatenate([jnp.diagonal(sim, b)] * 2) / tau
    masked = jnp.where(jnp.eye(n, dtype=bool), -jnp.inf, logits)
    lse = jax.scipy.special.logsumexp(masked, axis=-1)
    return jnp.mean(lse - pos)


if __name__ == "__main__":
    tau = 0.5
    key = jax.random.PRNGKey(0)
    k1, k2, k3, k4, k5, k6 = jax.random.split(key, 6)

    # Case 1: single-tile grid, fully-resident columns (batch=8, hidden=128).
    x1 = jax.random.normal(k1, (8, 128), dtype=jnp.float32)
    y1 = jax.random.normal(k2, (8, 128), dtype=jnp.float32)
    loss1 = contrastive_loss(x1, y1, tau=tau)
    jax.block_until_ready(loss1)
    np.testing.assert_allclose(np.asarray(loss1),
                               np.asarray(_reference_loss(x1, y1, tau)),
                               rtol=2e-2, atol=2e-2)

    # Case 2: two row blocks (megacore-parallel axis), resident columns.
    x2 = jax.random.normal(k3, (16, 128), dtype=jnp.float32)
    y2 = jax.random.normal(k4, (16, 128), dtype=jnp.float32)
    loss2 = contrastive_loss(x2, y2, tau=tau)
    jax.block_until_ready(loss2)
    np.testing.assert_allclose(np.asarray(loss2),
                               np.asarray(_reference_loss(x2, y2, tau)),
                               rtol=2e-2, atol=2e-2)

    # Case 3: streamed columns (2x2 grid) exercising the online logsumexp and
    # the diagonal masking on off/on-diagonal tiles.
    x3 = jax.random.normal(k5, (256, 64), dtype=jnp.float32)
    y3 = jax.random.normal(k6, (256, 64), dtype=jnp.float32)
    loss3 = contrastive_loss(x3, y3, tau=tau, row_block=128, col_block=128)
    jax.block_until_ready(loss3)
    np.testing.assert_allclose(np.asarray(loss3),
                               np.asarray(_reference_loss(x3, y3, tau)),
                               rtol=2e-2, atol=2e-2)

    print("KERNEL_OK")
</pallas_src>

<mosaic_0001>
module attributes {stable_mosaic.version = 11 : i64} {
  func.func @_contrastive_kernel(%arg0: i32, %arg1: i32, %arg2: memref<8x128xbf16, #tpu.memory_space<vmem>>, %arg3: memref<8x128xbf16, #tpu.memory_space<vmem>>, %arg4: memref<128x8xbf16, #tpu.memory_space<vmem>>, %arg5: memref<128x8xbf16, #tpu.memory_space<vmem>>, %arg6: memref<8x1xf32, #tpu.memory_space<vmem>>, %arg7: memref<8x1xf32, #tpu.memory_space<vmem>>, %arg8: memref<8x1xf32, #tpu.memory_space<vmem>>, %arg9: memref<8x1xf32, #tpu.memory_space<vmem>>, %arg10: memref<8x1xf32, #tpu.memory_space<vmem>>, %arg11: memref<8x1xf32, #tpu.memory_space<vmem>>) attributes {dimension_semantics = [#tpu.dimension_semantics<parallel>, #tpu.dimension_semantics<arbitrary>], iteration_bounds = array<i64: 1, 1>, scalar_prefetch = 0 : i64, scratch_operands = 4 : i64, tpu.core_type = #tpu.core_type<tc>, window_params = [{transform_indices = @transform_0, window_bounds = array<i64: 8, 128>}, {transform_indices = @transform_1, window_bounds = array<i64: 8, 128>}, {transform_indices = @transform_2, window_bounds = array<i64: 128, 8>}, {transform_indices = @transform_3, window_bounds = array<i64: 128, 8>}, {transform_indices = @transform_4, window_bounds = array<i64: 8, 1>}, {transform_indices = @transform_5, window_bounds = array<i64: 8, 1>}]} {
    %c0_i32 = arith.constant 0 : i32
    %0 = arith.cmpi eq, %arg1, %c0_i32 : i32
    %1 = arith.extui %0 : i1 to i32
    %c0_i32_0 = arith.constant 0 : i32
    %2 = arith.cmpi ne, %1, %c0_i32_0 : i32
    scf.if %2 {
      %cst_40 = arith.constant -1.000000e+30 : f32
      %77 = vector.broadcast %cst_40 : f32 to vector<8x1xf32>
      %c0_41 = arith.constant 0 : index
      %c0_42 = arith.constant 0 : index
      %78 = vector.load %arg8[%c0_41, %c0_42] : memref<8x1xf32, #tpu.memory_space<vmem>>, vector<8x1xf32>
      tpu.vector_store %arg8[%c0_41, %c0_42], %77 {strides = array<i32>} : memref<8x1xf32, #tpu.memory_space<vmem>>, vector<8x1xf32>,
      %cst_43 = arith.constant -1.000000e+30 : f32
      %79 = vector.broadcast %cst_43 : f32 to vector<8x1xf32>
      %c0_44 = arith.constant 0 : index
      %c0_45 = arith.constant 0 : index
      %80 = vector.load %arg10[%c0_44, %c0_45] : memref<8x1xf32, #tpu.memory_space<vmem>>, vector<8x1xf32>
      tpu.vector_store %arg10[%c0_44, %c0_45], %79 {strides = array<i32>} : memref<8x1xf32, #tpu.memory_space<vmem>>, vector<8x1xf32>,
      %cst_46 = arith.constant 0.000000e+00 : f32
      %81 = vector.broadcast %cst_46 : f32 to vector<8x1xf32>
      %c0_47 = arith.constant 0 : index
      %c0_48 = arith.constant 0 : index
      %82 = vector.load %arg9[%c0_47, %c0_48] : memref<8x1xf32, #tpu.memory_space<vmem>>, vector<8x1xf32>
      tpu.vector_store %arg9[%c0_47, %c0_48], %81 {strides = array<i32>} : memref<8x1xf32, #tpu.memory_space<vmem>>, vector<8x1xf32>,
      %cst_49 = arith.constant 0.000000e+00 : f32
      %83 = vector.broadcast %cst_49 : f32 to vector<8x1xf32>
      %c0_50 = arith.constant 0 : index
      %c0_51 = arith.constant 0 : index
      %84 = vector.load %arg11[%c0_50, %c0_51] : memref<8x1xf32, #tpu.memory_space<vmem>>, vector<8x1xf32>
      tpu.vector_store %arg11[%c0_50, %c0_51], %83 {strides = array<i32>} : memref<8x1xf32, #tpu.memory_space<vmem>>, vector<8x1xf32>,
    } else {
    }
    %c0 = arith.constant 0 : index
    %c0_1 = arith.constant 0 : index
    %3 = vector.load %arg2[%c0, %c0_1] : memref<8x128xbf16, #tpu.memory_space<vmem>>, vector<8x128xbf16>
    %c0_2 = arith.constant 0 : index
    %c0_3 = arith.constant 0 : index
    %4 = vector.load %arg3[%c0_2, %c0_3] : memref<8x128xbf16, #tpu.memory_space<vmem>>, vector<8x128xbf16>
    %c0_4 = arith.constant 0 : index
    %c0_5 = arith.constant 0 : index
    %5 = vector.load %arg4[%c0_4, %c0_5] : memref<128x8xbf16, #tpu.memory_space<vmem>>, vector<128x8xbf16>
    %c0_6 = arith.constant 0 : index
    %c0_7 = arith.constant 0 : index
    %6 = vector.load %arg5[%c0_6, %c0_7] : memref<128x8xbf16, #tpu.memory_space<vmem>>, vector<128x8xbf16>
    %cst = arith.constant dense<0.000000e+00> : vector<8x8xf32>
    %7 = tpu.matmul %3, %5, %cst {dimension_numbers = #tpu.dot_dimension_numbers<[1], [0], [0], [1], [0, 0, 1, 1], [], []>} : vector<8x128xbf16>, vector<128x8xbf16>, vector<8x8xf32> -> vector<8x8xf32>
    %cst_8 = arith.constant dense<0.000000e+00> : vector<8x8xf32>
    %8 = tpu.matmul %3, %6, %cst_8 {dimension_numbers = #tpu.dot_dimension_numbers<[1], [0], [0], [1], [0, 0, 1, 1], [], []>} : vector<8x128xbf16>, vector<128x8xbf16>, vector<8x8xf32> -> vector<8x8xf32>
    %cst_9 = arith.constant dense<0.000000e+00> : vector<8x8xf32>
    %9 = tpu.matmul %4, %5, %cst_9 {dimension_numbers = #tpu.dot_dimension_numbers<[1], [0], [0], [1], [0, 0, 1, 1], [], []>} : vector<8x128xbf16>, vector<128x8xbf16>, vector<8x8xf32> -> vector<8x8xf32>
    %cst_10 = arith.constant dense<0.000000e+00> : vector<8x8xf32>
    %10 = tpu.matmul %4, %6, %cst_10 {dimension_numbers = #tpu.dot_dimension_numbers<[1], [0], [0], [1], [0, 0, 1, 1], [], []>} : vector<8x128xbf16>, vector<128x8xbf16>, vector<8x8xf32> -> vector<8x8xf32>
    %11 = tpu.iota {dimensions = array<i32: 0>} : vector<8x8xi32>
    %c8_i32 = arith.constant 8 : i32
    %12 = arith.muli %arg0, %c8_i32 : i32
    %13 = vector.broadcast %12 : i32 to vector<8x8xi32>
    %14 = arith.addi %11, %13 : vector<8x8xi32>
    %15 = tpu.iota {dimensions = array<i32: 1>} : vector<8x8xi32>
    %c8_i32_11 = arith.constant 8 : i32
    %16 = arith.muli %arg1, %c8_i32_11 : i32
    %17 = vector.broadcast %16 : i32 to vector<8x8xi32>
    %18 = arith.addi %15, %17 : vector<8x8xi32>
    %19 = arith.cmpi eq, %14, %18 : vector<8x8xi32>
    %cst_12 = arith.constant -1.000000e+30 : f32
    %20 = vector.broadcast %cst_12 : f32 to vector<8x8xf32>
    %21 = arith.select %19, %20, %7 : vector<8x8xi1>, vector<8x8xf32>
    %cst_13 = arith.constant -1.000000e+30 : f32
    %22 = vector.broadcast %cst_13 : f32 to vector<8x8xf32>
    %23 = arith.select %19, %22, %10 : vector<8x8xi1>, vector<8x8xf32>
    %c0_14 = arith.constant 0 : index
    %c0_15 = arith.constant 0 : index
    %24 = vector.load %arg8[%c0_14, %c0_15] : memref<8x1xf32, #tpu.memory_space<vmem>>, vector<8x1xf32>
    %cst_16 = arith.constant dense<0xFF800000> : vector<8xf32>
    %25 = vector.multi_reduction <maximumf>, %21, %cst_16 [1] : vector<8x8xf32> to vector<8xf32>
    %26 = vector.shape_cast %25 : vector<8xf32> to vector<8x1xf32>
    %cst_17 = arith.constant dense<0xFF800000> : vector<8xf32>
    %27 = vector.multi_reduction <maximumf>, %8, %cst_17 [1] : vector<8x8xf32> to vector<8xf32>
    %28 = vector.shape_cast %27 : vector<8xf32> to vector<8x1xf32>
    %29 = arith.maximumf %26, %28 : vector<8x1xf32>
    %30 = arith.maximumf %24, %29 : vector<8x1xf32>
    %31 = arith.subf %24, %30 : vector<8x1xf32>
    %32 = math.exp %31 : vector<8x1xf32>
    %c0_18 = arith.constant 0 : index
    %c0_19 = arith.constant 0 : index
    %33 = vector.load %arg9[%c0_18, %c0_19] : memref<8x1xf32, #tpu.memory_space<vmem>>, vector<8x1xf32>
    %34 = arith.mulf %32, %33 : vector<8x1xf32>
    %35 = vector.broadcast %30 : vector<8x1xf32> to vector<8x8xf32>
    %36 = arith.subf %21, %35 : vector<8x8xf32>
    %37 = math.exp %36 : vector<8x8xf32>
    %cst_20 = arith.constant dense<0.000000e+00> : vector<8xf32>
    %38 = vector.multi_reduction <add>, %37, %cst_20 [1] : vector<8x8xf32> to vector<8xf32>
    %39 = vector.shape_cast %38 : vector<8xf32> to vector<8x1xf32>
    %40 = arith.addf %34, %39 : vector<8x1xf32>
    %41 = vector.broadcast %30 : vector<8x1xf32> to vector<8x8xf32>
    %42 = arith.subf %8, %41 : vector<8x8xf32>
    %43 = math.exp %42 : vector<8x8xf32>
    %cst_21 = arith.constant dense<0.000000e+00> : vector<8xf32>
    %44 = vector.multi_reduction <add>, %43, %cst_21 [1] : vector<8x8xf32> to vector<8xf32>
    %45 = vector.shape_cast %44 : vector<8xf32> to vector<8x1xf32>
    %46 = arith.addf %40, %45 : vector<8x1xf32>
    %c0_22 = arith.constant 0 : index
    %c0_23 = arith.constant 0 : index
    %47 = vector.load %arg8[%c0_22, %c0_23] : memref<8x1xf32, #tpu.memory_space<vmem>>, vector<8x1xf32>
    tpu.vector_store %arg8[%c0_22, %c0_23], %30 {strides = array<i32>} : memref<8x1xf32, #tpu.memory_space<vmem>>, vector<8x1xf32>,
    %c0_24 = arith.constant 0 : index
    %c0_25 = arith.constant 0 : index
    %48 = vector.load %arg9[%c0_24, %c0_25] : memref<8x1xf32, #tpu.memory_space<vmem>>, vector<8x1xf32>
    tpu.vector_store %arg9[%c0_24, %c0_25], %46 {strides = array<i32>} : memref<8x1xf32, #tpu.memory_space<vmem>>, vector<8x1xf32>,
    %c0_26 = arith.constant 0 : index
    %c0_27 = arith.constant 0 : index
    %49 = vector.load %arg10[%c0_26, %c0_27] : memref<8x1xf32, #tpu.memory_space<vmem>>, vector<8x1xf32>
    %cst_28 = arith.constant dense<0xFF800000> : vector<8xf32>
    %50 = vector.multi_reduction <maximumf>, %9, %cst_28 [1] : vector<8x8xf32> to vector<8xf32>
    %51 = vector.shape_cast %50 : vector<8xf32> to vector<8x1xf32>
    %cst_29 = arith.constant dense<0xFF800000> : vector<8xf32>
    %52 = vector.multi_reduction <maximumf>, %23, %cst_29 [1] : vector<8x8xf32> to vector<8xf32>
    %53 = vector.shape_cast %52 : vector<8xf32> to vector<8x1xf32>
    %54 = arith.maximumf %51, %53 : vector<8x1xf32>
    %55 = arith.maximumf %49, %54 : vector<8x1xf32>
    %56 = arith.subf %49, %55 : vector<8x1xf32>
    %57 = math.exp %56 : vector<8x1xf32>
    %c0_30 = arith.constant 0 : index
    %c0_31 = arith.constant 0 : index
    %58 = vector.load %arg11[%c0_30, %c0_31] : memref<8x1xf32, #tpu.memory_space<vmem>>, vector<8x1xf32>
    %59 = arith.mulf %57, %58 : vector<8x1xf32>
    %60 = vector.broadcast %55 : vector<8x1xf32> to vector<8x8xf32>
    %61 = arith.subf %9, %60 : vector<8x8xf32>
    %62 = math.exp %61 : vector<8x8xf32>
    %cst_32 = arith.constant dense<0.000000e+00> : vector<8xf32>
    %63 = vector.multi_reduction <add>, %62, %cst_32 [1] : vector<8x8xf32> to vector<8xf32>
    %64 = vector.shape_cast %63 : vector<8xf32> to vector<8x1xf32>
    %65 = arith.addf %59, %64 : vector<8x1xf32>
    %66 = vector.broadcast %55 : vector<8x1xf32> to vector<8x8xf32>
    %67 = arith.subf %23, %66 : vector<8x8xf32>
    %68 = math.exp %67 : vector<8x8xf32>
    %cst_33 = arith.constant dense<0.000000e+00> : vector<8xf32>
    %69 = vector.multi_reduction <add>, %68, %cst_33 [1] : vector<8x8xf32> to vector<8xf32>
    %70 = vector.shape_cast %69 : vector<8xf32> to vector<8x1xf32>
    %71 = arith.addf %65, %70 : vector<8x1xf32>
    %c0_34 = arith.constant 0 : index
    %c0_35 = arith.constant 0 : index
    %72 = vector.load %arg10[%c0_34, %c0_35] : memref<8x1xf32, #tpu.memory_space<vmem>>, vector<8x1xf32>
    tpu.vector_store %arg10[%c0_34, %c0_35], %55 {strides = array<i32>} : memref<8x1xf32, #tpu.memory_space<vmem>>, vector<8x1xf32>,
    %c0_36 = arith.constant 0 : index
    %c0_37 = arith.constant 0 : index
    %73 = vector.load %arg11[%c0_36, %c0_37] : memref<8x1xf32, #tpu.memory_space<vmem>>, vector<8x1xf32>
    tpu.vector_store %arg11[%c0_36, %c0_37], %71 {strides = array<i32>} : memref<8x1xf32, #tpu.memory_space<vmem>>, vector<8x1xf32>,
    %c0_i32_38 = arith.constant 0 : i32
    %74 = arith.cmpi eq, %arg1, %c0_i32_38 : i32
    %75 = arith.extui %74 : i1 to i32
    %c0_i32_39 = arith.constant 0 : i32
    %76 = arith.cmpi ne, %75, %c0_i32_39 : i32
    scf.if %76 {
      %77 = arith.extf %3 : vector<8x128xbf16> to vector<8x128xf32>
      %78 = arith.extf %4 : vector<8x128xbf16> to vector<8x128xf32>
      %79 = arith.mulf %77, %78 : vector<8x128xf32>
      %cst_40 = arith.constant dense<0.000000e+00> : vector<8xf32>
      %80 = vector.multi_reduction <add>, %79, %cst_40 [1] : vector<8x128xf32> to vector<8xf32>
      %81 = vector.shape_cast %80 : vector<8xf32> to vector<8x1xf32>
      %c0_41 = arith.constant 0 : index
      %c0_42 = arith.constant 0 : index
      %82 = vector.load %arg8[%c0_41, %c0_42] : memref<8x1xf32, #tpu.memory_space<vmem>>, vector<8x1xf32>
      %c0_43 = arith.constant 0 : index
      %c0_44 = arith.constant 0 : index
      %83 = vector.load %arg9[%c0_43, %c0_44] : memref<8x1xf32, #tpu.memory_space<vmem>>, vector<8x1xf32>
      %84 = math.log %83 : vector<8x1xf32>
      %85 = arith.addf %82, %84 : vector<8x1xf32>
      %86 = arith.subf %85, %81 : vector<8x1xf32>
      %c0_45 = arith.constant 0 : index
      %c0_46 = arith.constant 0 : index
      %87 = vector.load %arg6[%c0_45, %c0_46] : memref<8x1xf32, #tpu.memory_space<vmem>>, vector<8x1xf32>
      tpu.vector_store %arg6[%c0_45, %c0_46], %86 {strides = array<i32>} : memref<8x1xf32, #tpu.memory_space<vmem>>, vector<8x1xf32>,
      %c0_47 = arith.constant 0 : index
      %c0_48 = arith.constant 0 : index
      %88 = vector.load %arg10[%c0_47, %c0_48] : memref<8x1xf32, #tpu.memory_space<vmem>>, vector<8x1xf32>
      %c0_49 = arith.constant 0 : index
      %c0_50 = arith.constant 0 : index
      %89 = vector.load %arg11[%c0_49, %c0_50] : memref<8x1xf32, #tpu.memory_space<vmem>>, vector<8x1xf32>
      %90 = math.log %89 : vector<8x1xf32>
      %91 = arith.addf %88, %90 : vector<8x1xf32>
      %92 = arith.subf %91, %81 : vector<8x1xf32>
      %c0_51 = arith.constant 0 : index
      %c0_52 = arith.constant 0 : index
      %93 = vector.load %arg7[%c0_51, %c0_52] : memref<8x1xf32, #tpu.memory_space<vmem>>, vector<8x1xf32>
      tpu.vector_store %arg7[%c0_51, %c0_52], %92 {strides = array<i32>} : memref<8x1xf32, #tpu.memory_space<vmem>>, vector<8x1xf32>,
    } else {
    }
    return
  }
  func.func @transform_0(%arg0: i32, %arg1: i32) -> (i32, i32) {
    %c0_i32 = arith.constant 0 : i32
    %c0_i32_0 = arith.constant 0 : i32
    return %arg0, %c0_i32 : i32, i32
  }
  func.func @transform_1(%arg0: i32, %arg1: i32) -> (i32, i32) {
    %c0_i32 = arith.constant 0 : i32
    %c0_i32_0 = arith.constant 0 : i32
    return %arg0, %c0_i32 : i32, i32
  }
  func.func @transform_2(%arg0: i32, %arg1: i32) -> (i32, i32) {
    %c0_i32 = arith.constant 0 : i32
    %c0_i32_0 = arith.constant 0 : i32
    return %c0_i32, %arg1 : i32, i32
  }
  func.func @transform_3(%arg0: i32, %arg1: i32) -> (i32, i32) {
    %c0_i32 = arith.constant 0 : i32
    %c0_i32_0 = arith.constant 0 : i32
    return %c0_i32, %arg1 : i32, i32
  }
  func.func @transform_4(%arg0: i32, %arg1: i32) -> (i32, i32) {
    %c0_i32 = arith.constant 0 : i32
    %c0_i32_0 = arith.constant 0 : i32
    return %arg0, %c0_i32 : i32, i32
  }
  func.func @transform_5(%arg0: i32, %arg1: i32) -> (i32, i32) {
    %c0_i32 = arith.constant 0 : i32
    %c0_i32_0 = arith.constant 0 : i32
    return %arg0, %c0_i32 : i32, i32
  }
}

</mosaic_0001>

<llo_original>
// kernel: contrastive_loss.1
$region0: #{contrastive_loss.1}
  #allocation0 [shape = 'u32[]', space=smem, size = 0x4, offset = 0x4, fixed_abs, tag = 'smem constant byte address 0x4 - core index']
  #allocation1 [shape = 'u32[144,128]{1,0:T(1,128)}', space=vmem, size = 0x12000, scoped, tag = 'internal scratch']
  #allocation2 [shape = 'f32[8,1]{1,0:T(8,128)}', space=vmem, size = 0x1000, scoped, tag = 'scratch operand']
  #allocation3 [shape = 'f32[8,1]{1,0:T(8,128)}', space=vmem, size = 0x1000, scoped, tag = 'scratch operand']
  #allocation4 [shape = 'f32[8,1]{1,0:T(8,128)}', space=vmem, size = 0x1000, scoped, tag = 'scratch operand']
  #allocation5 [shape = 'f32[8,1]{1,0:T(8,128)}', space=vmem, size = 0x1000, scoped, tag = 'scratch operand']
  %s0 = inlined_call_operand.vmem [shape: bf16[8,128], index: 0, kind: input, shape index: {}]
  %s1 = inlined_call_operand.vmem [shape: bf16[8,128], index: 1, kind: input, shape index: {}]
  %s2 = inlined_call_operand.vmem [shape: bf16[128,8], index: 2, kind: input, shape index: {}]
  %s3 = inlined_call_operand.vmem [shape: bf16[128,8], index: 3, kind: input, shape index: {}]
  %s4 = inlined_call_operand.vmem [shape: f32[8,1], index: 4, kind: output, shape index: {0}]
  %s5 = inlined_call_operand.vmem [shape: f32[8,1], index: 5, kind: output, shape index: {1}]
  %6 = xla_tuple %s4, %s5
  %s7 = sld [smem:[#allocation0]]
  $region42: #{contrastive_loss.1} parent=0
    _
  %s9 = ssub.s32 1, %s7
  %s10 = scalar_select 0, %s9, %s7
  // Predicated region
  $region2: #{contrastive_loss.1} parent=0 // pred_check
    _
  $region3: #{contrastive_loss.1} parent=0 // pred_check_branch
    %12 = sbr.rel (0) target = $region5
  $region4: #{contrastive_loss.1} parent=0 // pred_region
    _
  $region5: #{contrastive_loss.1} parent=0 // pred_fallthru
    _
  // Predicated region
  $region6: #{contrastive_loss.1} parent=0 // pred_check
    _
  $region7: #{contrastive_loss.1} parent=0 // pred_check_branch
    %14 = sbr.rel (0) target = $region9
  $region8: #{contrastive_loss.1} parent=0 // pred_region
    _
  $region9: #{contrastive_loss.1} parent=0 // pred_fallthru
    _
  // Predicated region
  $region10: #{contrastive_loss.1} parent=0 // pred_check
    _
  $region11: #{contrastive_loss.1} parent=0 // pred_check_branch
    %16 = sbr.rel (0) target = $region13
  $region12: #{contrastive_loss.1} parent=0 // pred_region
    _
  $region13: #{contrastive_loss.1} parent=0 // pred_fallthru
    _
  // Predicated region
  $region14: #{contrastive_loss.1} parent=0 // pred_check
    _
  $region15: #{contrastive_loss.1} parent=0 // pred_check_branch
    %18 = sbr.rel (0) target = $region17
  $region16: #{contrastive_loss.1} parent=0 // pred_region
    _
  $region17: #{contrastive_loss.1} parent=0 // pred_fallthru
    _
  %p20 = scmp.eq.s32.totalorder 0, 0
  // Predicated region
  $region18: #{contrastive_loss.1} parent=0 // pred_check
    %p21 = pneg %p20
  $region19: #{contrastive_loss.1} parent=0 // pred_check_branch
    %23 = sbr.rel (%p21) target = $region21
  $region20: #{contrastive_loss.1} parent=0 // pred_region
    %vm24 = vcmask 7168
    %25 = vst.msk [vmem:[#allocation2] sm:$0xff] %vm24, -1e+30
    %26 = vst.msk [vmem:[#allocation4] sm:$0xff] %vm24, -1e+30
    %27 = vst.msk [vmem:[#allocation3] sm:$0xff] %vm24, 0.0
    %28 = vst.msk [vmem:[#allocation5] sm:$0xff] %vm24, 0.0
  $region21: #{contrastive_loss.1} parent=0 // pred_fallthru
    _
  %v29 = vld [vmem:[%s0] sm:$0xf]
  %v30 = vld [vmem:[%s1] sm:$0xf]
  %v31 = vld [vmem:[%s2] sm:$0xf]
  %v32 = vld [vmem:[%s2 + $0x4] sm:$0xf]
  %v33 = vld [vmem:[%s2 + $0x8] sm:$0xf]
  %v34 = vld [vmem:[%s2 + $0xc] sm:$0xf]
  %v35 = vld [vmem:[%s2 + $0x10] sm:$0xf]
  %v36 = vld [vmem:[%s2 + $0x14] sm:$0xf]
  %v37 = vld [vmem:[%s2 + $0x18] sm:$0xf]
  %v38 = vld [vmem:[%s2 + $0x1c] sm:$0xf]
  %v39 = vld [vmem:[%s2 + $0x20] sm:$0xf]
  %v40 = vld [vmem:[%s2 + $0x24] sm:$0xf]
  %v41 = vld [vmem:[%s2 + $0x28] sm:$0xf]
  %v42 = vld [vmem:[%s2 + $0x2c] sm:$0xf]
  %v43 = vld [vmem:[%s2 + $0x30] sm:$0xf]
  %v44 = vld [vmem:[%s2 + $0x34] sm:$0xf]
  %v45 = vld [vmem:[%s2 + $0x38] sm:$0xf]
  %v46 = vld [vmem:[%s2 + $0x3c] sm:$0xf]
  %v47 = vld [vmem:[%s3] sm:$0xf]
  %v48 = vld [vmem:[%s3 + $0x4] sm:$0xf]
  %v49 = vld [vmem:[%s3 + $0x8] sm:$0xf]
  %v50 = vld [vmem:[%s3 + $0xc] sm:$0xf]
  %v51 = vld [vmem:[%s3 + $0x10] sm:$0xf]
  %v52 = vld [vmem:[%s3 + $0x14] sm:$0xf]
  %v53 = vld [vmem:[%s3 + $0x18] sm:$0xf]
  %v54 = vld [vmem:[%s3 + $0x1c] sm:$0xf]
  %v55 = vld [vmem:[%s3 + $0x20] sm:$0xf]
  %v56 = vld [vmem:[%s3 + $0x24] sm:$0xf]
  %v57 = vld [vmem:[%s3 + $0x28] sm:$0xf]
  %v58 = vld [vmem:[%s3 + $0x2c] sm:$0xf]
  %v59 = vld [vmem:[%s3 + $0x30] sm:$0xf]
  %v60 = vld [vmem:[%s3 + $0x34] sm:$0xf]
  %v61 = vld [vmem:[%s3 + $0x38] sm:$0xf]
  %v62 = vld [vmem:[%s3 + $0x3c] sm:$0xf]
  %v79 = vunpack.c.l.b16 %v31
  %v80 = vunpack.c.l.b16 %v32
  %v81 = vunpack.c.l.b16 %v33
  %v82 = vunpack.c.l.b16 %v34
  %v83 = vunpack.c.l.b16 %v35
  %v84 = vunpack.c.l.b16 %v36
  %v85 = vunpack.c.l.b16 %v37
  %v86 = vunpack.c.l.b16 %v38
  %v87 = vunpack.c.l.b16 %v39
  %v88 = vunpack.c.l.b16 %v40
  %v89 = vunpack.c.l.b16 %v41
  %v90 = vunpack.c.l.b16 %v42
  %v91 = vunpack.c.l.b16 %v43
  %v92 = vunpack.c.l.b16 %v44
  %v93 = vunpack.c.l.b16 %v45
  %v94 = vunpack.c.l.b16 %v46
  %v95 = vpack.c.b16 %v80, %v79
  %v96 = vpack.c.b16 %v82, %v81
  %v97 = vpack.c.b16 %v84, %v83
  %v98 = vpack.c.b16 %v86, %v85
  %v99 = vpack.c.b16 %v88, %v87
  %v100 = vpack.c.b16 %v90, %v89
  %v101 = vpack.c.b16 %v92, %v91
  %v102 = vpack.c.b16 %v94, %v93
  %111 = vmatprep.subr.bf16.mxu0 0
  %112 = vmatpush1.bf16.msra.mxu0 %v95
  %113 = vmatprep.subr.bf16.mxu0 0
  %114 = vmatpush1.bf16.msra.mxu0 %v96
  %115 = vmatprep.subr.bf16.mxu0 0
  %116 = vmatpush1.bf16.msra.mxu0 %v97
  %117 = vmatprep.subr.bf16.mxu0 0
  %118 = vmatpush1.bf16.msra.mxu0 %v98
  %119 = vmatprep.subr.bf16.mxu0 0
  %120 = vmatpush1.bf16.msra.mxu0 %v99
  %121 = vmatprep.subr.bf16.mxu0 0
  %122 = vmatpush1.bf16.msra.mxu0 %v100
  %123 = vmatprep.subr.bf16.mxu0 0
  %124 = vmatpush1.bf16.msra.mxu0 %v101
  %125 = vmatprep.subr.bf16.mxu0 0
  %126 = vmatpush1.bf16.msra.mxu0 %v102
  %127 = vmatprep.subr.bf16.mxu0 0
  %128 = vmatpush1.bf16.msra.mxu0 0
  %129 = vmatprep.subr.bf16.mxu0 0
  %130 = vmatpush1.bf16.msra.mxu0 0
  %131 = vmatprep.subr.bf16.mxu0 0
  %132 = vmatpush1.bf16.msra.mxu0 0
  %133 = vmatprep.subr.bf16.mxu0 0
  %134 = vmatpush1.bf16.msra.mxu0 0
  %135 = vmatprep.subr.bf16.mxu0 0
  %136 = vmatpush1.bf16.msra.mxu0 0
  %137 = vmatprep.subr.bf16.mxu0 0
  %138 = vmatpush1.bf16.msra.mxu0 0
  %139 = vmatprep.subr.bf16.mxu0 0
  %140 = vmatpush1.bf16.msra.mxu0 0
  %141 = vmatprep.subr.bf16.mxu0 0
  %142 = vmatpush1.bf16.msra.mxu0 0
  %143 = vmatprep.mubr.bf16.mxu0 0
  %144 = vmatmul.mubr.bf16.gmra.mrb[0].mxu0 %v29
  %v145 = vpop.f32.mrb[0].mxu0
  %v146 = vadd.f32 0.0, %v145
  %v147 = vpop.f32.mrb[0].mxu0
  %v148 = vpop.f32.mrb[0].mxu0
  %v149 = vpop.f32.mrb[0].mxu0
  %150 = vdwg.mxu0
  %v167 = vunpack.c.l.b16 %v47
  %v168 = vunpack.c.l.b16 %v48
  %v169 = vunpack.c.l.b16 %v49
  %v170 = vunpack.c.l.b16 %v50
  %v171 = vunpack.c.l.b16 %v51
  %v172 = vunpack.c.l.b16 %v52
  %v173 = vunpack.c.l.b16 %v53
  %v174 = vunpack.c.l.b16 %v54
  %v175 = vunpack.c.l.b16 %v55
  %v176 = vunpack.c.l.b16 %v56
  %v177 = vunpack.c.l.b16 %v57
  %v178 = vunpack.c.l.b16 %v58
  %v179 = vunpack.c.l.b16 %v59
  %v180 = vunpack.c.l.b16 %v60
  %v181 = vunpack.c.l.b16 %v61
  %v182 = vunpack.c.l.b16 %v62
  %v183 = vpack.c.b16 %v168, %v167
  %v184 = vpack.c.b16 %v170, %v169
  %v185 = vpack.c.b16 %v172, %v171
  %v186 = vpack.c.b16 %v174, %v173
  %v187 = vpack.c.b16 %v176, %v175
  %v188 = vpack.c.b16 %v178, %v177
  %v189 = vpack.c.b16 %v180, %v179
  %v190 = vpack.c.b16 %v182, %v181
  %199 = vmatprep.subr.bf16.mxu0 0
  %200 = vmatpush1.bf16.msra.mxu0 %v183
  %201 = vmatprep.subr.bf16.mxu0 0
  %202 = vmatpush1.bf16.msra.mxu0 %v184
  %203 = vmatprep.subr.bf16.mxu0 0
  %204 = vmatpush1.bf16.msra.mxu0 %v185
  %205 = vmatprep.subr.bf16.mxu0 0
  %206 = vmatpush1.bf16.msra.mxu0 %v186
  %207 = vmatprep.subr.bf16.mxu0 0
  %208 = vmatpush1.bf16.msra.mxu0 %v187
  %209 = vmatprep.subr.bf16.mxu0 0
  %210 = vmatpush1.bf16.msra.mxu0 %v188
  %211 = vmatprep.subr.bf16.mxu0 0
  %212 = vmatpush1.bf16.msra.mxu0 %v189
  %213 = vmatprep.subr.bf16.mxu0 0
  %214 = vmatpush1.bf16.msra.mxu0 %v190
  %215 = vmatprep.subr.bf16.mxu0 0
  %216 = vmatpush1.bf16.msra.mxu0 0
  %217 = vmatprep.subr.bf16.mxu0 0
  %218 = vmatpush1.bf16.msra.mxu0 0
  %219 = vmatprep.subr.bf16.mxu0 0
  %220 = vmatpush1.bf16.msra.mxu0 0
  %221 = vmatprep.subr.bf16.mxu0 0
  %222 = vmatpush1.bf16.msra.mxu0 0
  %223 = vmatprep.subr.bf16.mxu0 0
  %224 = vmatpush1.bf16.msra.mxu0 0
  %225 = vmatprep.subr.bf16.mxu0 0
  %226 = vmatpush1.bf16.msra.mxu0 0
  %227 = vmatprep.subr.bf16.mxu0 0
  %228 = vmatpush1.bf16.msra.mxu0 0
  %229 = vmatprep.subr.bf16.mxu0 0
  %230 = vmatpush1.bf16.msra.mxu0 0
  %231 = vmatprep.mubr.bf16.mxu0 0
  %232 = vmatmul.mubr.bf16.gmra.mrb[0].mxu0 %v29
  %v233 = vpop.f32.mrb[0].mxu0
  %v234 = vadd.f32 0.0, %v233
  %v235 = vpop.f32.mrb[0].mxu0
  %v236 = vpop.f32.mrb[0].mxu0
  %v237 = vpop.f32.mrb[0].mxu0
  %238 = vdwg.mxu0
  %239 = vmatprep.subr.bf16.mxu0 0
  %240 = vmatpush1.bf16.msra.mxu0 %v95
  %241 = vmatprep.subr.bf16.mxu0 0
  %242 = vmatpush1.bf16.msra.mxu0 %v96
  %243 = vmatprep.subr.bf16.mxu0 0
  %244 = vmatpush1.bf16.msra.mxu0 %v97
  %245 = vmatprep.subr.bf16.mxu0 0
  %246 = vmatpush1.bf16.msra.mxu0 %v98
  %247 = vmatprep.subr.bf16.mxu0 0
  %248 = vmatpush1.bf16.msra.mxu0 %v99
  %249 = vmatprep.subr.bf16.mxu0 0
  %250 = vmatpush1.bf16.msra.mxu0 %v100
  %251 = vmatprep.subr.bf16.mxu0 0
  %252 = vmatpush1.bf16.msra.mxu0 %v101
  %253 = vmatprep.subr.bf16.mxu0 0
  %254 = vmatpush1.bf16.msra.mxu0 %v102
  %255 = vmatprep.subr.bf16.mxu0 0
  %256 = vmatpush1.bf16.msra.mxu0 0
  %257 = vmatprep.subr.bf16.mxu0 0
  %258 = vmatpush1.bf16.msra.mxu0 0
  %259 = vmatprep.subr.bf16.mxu0 0
  %260 = vmatpush1.bf16.msra.mxu0 0
  %261 = vmatprep.subr.bf16.mxu0 0
  %262 = vmatpush1.bf16.msra.mxu0 0
  %263 = vmatprep.subr.bf16.mxu0 0
  %264 = vmatpush1.bf16.msra.mxu0 0
  %265 = vmatprep.subr.bf16.mxu0 0
  %266 = vmatpush1.bf16.msra.mxu0 0
  %267 = vmatprep.subr.bf16.mxu0 0
  %268 = vmatpush1.bf16.msra.mxu0 0
  %269 = vmatprep.subr.bf16.mxu0 0
  %270 = vmatpush1.bf16.msra.mxu0 0
  %271 = vmatprep.mubr.bf16.mxu0 0
  %272 = vmatmul.mubr.bf16.gmra.mrb[0].mxu0 %v30
  %v273 = vpop.f32.mrb[0].mxu0
  %v274 = vadd.f32 0.0, %v273
  %v275 = vpop.f32.mrb[0].mxu0
  %v276 = vpop.f32.mrb[0].mxu0
  %v277 = vpop.f32.mrb[0].mxu0
  %278 = vdwg.mxu0
  %279 = vmatprep.subr.bf16.mxu0 0
  %280 = vmatpush1.bf16.msra.mxu0 %v183
  %281 = vmatprep.subr.bf16.mxu0 0
  %282 = vmatpush1.bf16.msra.mxu0 %v184
  %283 = vmatprep.subr.bf16.mxu0 0
  %284 = vmatpush1.bf16.msra.mxu0 %v185
  %285 = vmatprep.subr.bf16.mxu0 0
  %286 = vmatpush1.bf16.msra.mxu0 %v186
  %287 = vmatprep.subr.bf16.mxu0 0
  %288 = vmatpush1.bf16.msra.mxu0 %v187
  %289 = vmatprep.subr.bf16.mxu0 0
  %290 = vmatpush1.bf16.msra.mxu0 %v188
  %291 = vmatprep.subr.bf16.mxu0 0
  %292 = vmatpush1.bf16.msra.mxu0 %v189
  %293 = vmatprep.subr.bf16.mxu0 0
  %294 = vmatpush1.bf16.msra.mxu0 %v190
  %295 = vmatprep.subr.bf16.mxu0 0
  %296 = vmatpush1.bf16.msra.mxu0 0
  %297 = vmatprep.subr.bf16.mxu0 0
  %298 = vmatpush1.bf16.msra.mxu0 0
  %299 = vmatprep.subr.bf16.mxu0 0
  %300 = vmatpush1.bf16.msra.mxu0 0
  %301 = vmatprep.subr.bf16.mxu0 0
  %302 = vmatpush1.bf16.msra.mxu0 0
  %303 = vmatprep.subr.bf16.mxu0 0
  %304 = vmatpush1.bf16.msra.mxu0 0
  %305 = vmatprep.subr.bf16.mxu0 0
  %306 = vmatpush1.bf16.msra.mxu0 0
  %307 = vmatprep.subr.bf16.mxu0 0
  %308 = vmatpush1.bf16.msra.mxu0 0
  %309 = vmatprep.subr.bf16.mxu0 0
  %310 = vmatpush1.bf16.msra.mxu0 0
  %311 = vmatprep.mubr.bf16.mxu0 0
  %312 = vmatmul.mubr.bf16.gmra.mrb[0].mxu0 %v30
  %v313 = vpop.f32.mrb[0].mxu0
  %v314 = vadd.f32 0.0, %v313
  %v315 = vpop.f32.mrb[0].mxu0
  %v316 = vpop.f32.mrb[0].mxu0
  %v317 = vpop.f32.mrb[0].mxu0
  %318 = vdwg.mxu0
  %v319 = vlaneseq
  %v320 = vshrl.u32 %v319, 7
  %s321 = smul.u32 0, 8
  %v322 = vstv %s321
  %v323 = vadd.s32 %v320, %v322
  %v324 = vlaneseq
  %v325 = vand.u32 %v324, 127
  %s326 = smul.u32 0, 8
  %v327 = vstv %s326
  %v328 = vadd.s32 %v325, %v327
  %vm329 = vcmp.eq.s32.totalorder %v323, %v328
  %v330 = vsel %vm329, -1e+30, %v146
  %v331 = vsel %vm329, -1e+30, %v314
  %v332 = vld [vmem:[#allocation2] sm:$0xff]
  %vm333 = vcmask 64512
  %v334 = vsel %vm333, %v330, -inf
  %335 = vmax.xlane.f32.xlu0 %v334
  %v336 = vpop.xlane.xlu0 %335
  %v337 = vsel %vm333, %v234, -inf
  %338 = vmax.xlane.f32.xlu0 %v337
  %v339 = vpop.xlane.xlu0 %338
  %v340 = vmax.f32 %v336, %v339
  %v341 = vmax.f32 %v332, %v340
  %v342 = vsub.f32 %v332, %v341
  %v343 = vmul.f32 %v342, 1.442695
  %v344 = vpow.pop %v343
  %v345 = vld [vmem:[#allocation3] sm:$0xff]
  %v346 = vmul.f32 %v344, %v345
  %348 = vset.pattern.permute.xlu0 0
  %349 = vperm.xlu0 %348, %v341
  %v350 = vpop.permute.xlu0 %349
  %v352 = vsub.f32 %v330, %v350
  %v353 = vmul.f32 %v352, 1.442695
  %v354 = vpow.pop %v353
  %v355 = vsel %vm333, %v354, 0.0
  %356 = vadd.xlane.f32.xlu0 %v355
  %v357 = vpop.xlane.xlu0 %356
  %v358 = vadd.f32 %v346, %v357
  %v359 = vsub.f32 %v234, %v350
  %v360 = vmul.f32 %v359, 1.442695
  %v361 = vpow.pop %v360
  %v362 = vsel %vm333, %v361, 0.0
  %363 = vadd.xlane.f32.xlu0 %v362
  %v364 = vpop.xlane.xlu0 %363
  %v365 = vadd.f32 %v358, %v364
  %vm366 = vcmask 7168
  %367 = vst.msk [vmem:[#allocation2] sm:$0xff] %vm366, %v341
  %368 = vst.msk [vmem:[#allocation3] sm:$0xff] %vm366, %v365
  %v369 = vld [vmem:[#allocation4] sm:$0xff]
  %v370 = vsel %vm333, %v274, -inf
  %371 = vmax.xlane.f32.xlu0 %v370
  %v372 = vpop.xlane.xlu0 %371
  %v373 = vsel %vm333, %v331, -inf
  %374 = vmax.xlane.f32.xlu0 %v373
  %v375 = vpop.xlane.xlu0 %374
  %v376 = vmax.f32 %v372, %v375
  %v377 = vmax.f32 %v369, %v376
  %v378 = vsub.f32 %v369, %v377
  %v379 = vmul.f32 %v378, 1.442695
  %v380 = vpow.pop %v379
  %v381 = vld [vmem:[#allocation5] sm:$0xff]
  %v382 = vmul.f32 %v380, %v381
  %384 = vset.pattern.permute.xlu0 0
  %385 = vperm.xlu0 %384, %v377
  %v386 = vpop.permute.xlu0 %385
  %v388 = vsub.f32 %v274, %v386
  %v389 = vmul.f32 %v388, 1.442695
  %v390 = vpow.pop %v389
  %v391 = vsel %vm333, %v390, 0.0
  %392 = vadd.xlane.f32.xlu0 %v391
  %v393 = vpop.xlane.xlu0 %392
  %v394 = vadd.f32 %v382, %v393
  %v395 = vsub.f32 %v331, %v386
  %v396 = vmul.f32 %v395, 1.442695
  %v397 = vpow.pop %v396
  %v398 = vsel %vm333, %v397, 0.0
  %399 = vadd.xlane.f32.xlu0 %v398
  %v400 = vpop.xlane.xlu0 %399
  %v401 = vadd.f32 %v394, %v400
  %402 = vst.msk [vmem:[#allocation4] sm:$0xff] %vm366, %v377
  %403 = vst.msk [vmem:[#allocation5] sm:$0xff] %vm366, %v401
  // Predicated region
  $region22: #{contrastive_loss.1} parent=0 // pred_check
    %p404 = pneg %p20
  $region23: #{contrastive_loss.1} parent=0 // pred_check_branch
    %406 = sbr.rel (%p404) target = $region25
  $region24: #{contrastive_loss.1} parent=0 // pred_region
    %v407 = vunpack.c.l.bf16 %v29
    %v408 = vunpack.c.l.bf16 %v30
    %v409 = vmul.f32 %v407, %v408
    %410 = vadd.xlane.f32.xlu0 %v409
    %v411 = vpop.xlane.xlu0 %410
    %v412 = vld [vmem:[#allocation2] sm:$0xff]
    %v413 = vld [vmem:[#allocation3] sm:$0xff]
    %v414 = vlog2.pop %v413
    %v415 = vmul.f32 %v414, 0.6931472
    %v416 = vadd.f32 %v412, %v415
    %v417 = vsub.f32 %v416, %v411
    %418 = vst.msk [vmem:[%s4] sm:$0xff] %vm366, %v417
    %v419 = vld [vmem:[#allocation4] sm:$0xff]
    %v420 = vld [vmem:[#allocation5] sm:$0xff]
    %v421 = vlog2.pop %v420
    %v422 = vmul.f32 %v421, 0.6931472
    %v423 = vadd.f32 %v419, %v422
    %v424 = vsub.f32 %v423, %v411
    %425 = vst.msk [vmem:[%s5] sm:$0xff] %vm366, %v424
  $region25: #{contrastive_loss.1} parent=0 // pred_fallthru
    _
  // Predicated region
  $region26: #{contrastive_loss.1} parent=0 // pred_check
    _
  $region27: #{contrastive_loss.1} parent=0 // pred_check_branch
    %427 = sbr.rel (0) target = $region29
  $region28: #{contrastive_loss.1} parent=0 // pred_region
    _
  $region29: #{contrastive_loss.1} parent=0 // pred_fallthru
    _
  // Predicated region
  $region30: #{contrastive_loss.1} parent=0 // pred_check
    _
  $region31: #{contrastive_loss.1} parent=0 // pred_check_branch
    %429 = sbr.rel (0) target = $region33
  $region32: #{contrastive_loss.1} parent=0 // pred_region
    _
  $region33: #{contrastive_loss.1} parent=0 // pred_fallthru
    _
  // Predicated region
  $region34: #{contrastive_loss.1} parent=0 // pred_check
    _
  $region35: #{contrastive_loss.1} parent=0 // pred_check_branch
    %431 = sbr.rel (0) target = $region37
  $region36: #{contrastive_loss.1} parent=0 // pred_region
    _
  $region37: #{contrastive_loss.1} parent=0 // pred_fallthru
    _
  // Predicated region
  $region38: #{contrastive_loss.1} parent=0 // pred_check
    _
  $region39: #{contrastive_loss.1} parent=0 // pred_check_branch
    %433 = sbr.rel (0) target = $region41
  $region40: #{contrastive_loss.1} parent=0 // pred_region
    _
  $region41: #{contrastive_loss.1} parent=0 // pred_fallthru
    _

</llo_original>
